<compile_context>
chip_gen: v6e
topology: v6e:2x2x1
jax: 0.10.0
libtpu: 0.0.40
codegen_flags: <defaults>
</compile_context>

<pallas_src>
import functools
import math

import jax
import jax.numpy as jnp
from jax.experimental import pallas as pl
from jax.experimental.pallas import tpu as pltpu


STATE_DIM = 8
ACTION_DIM = 2
N_INPUTS = STATE_DIM + ACTION_DIM          # 10 (n_inputs default)
NEURONS = [400, 200, 200]                  # layers == 3
N_OUTPUTS = 1
DEFAULT_BLOCK_B = 2048                     # batch tile cap (review: 1024-2048)
VMEM_LIMIT_BYTES = 48 * 1024 * 1024        # above v5e's 16 MiB scoped default


def _round_up(x, m):
    return ((x + m - 1) // m) * m


def _choose_tile(B, block_b):
    """Balanced, sublane-aligned batch tiling with >=2 tiles for v7x megacore."""
    block_b = max(8, _round_up(block_b, 8))       # defensive 8-alignment
    num_tiles = pl.cdiv(B, block_b)
    if B >= 16:
        num_tiles = max(num_tiles, 2)             # keep both v7x TCs busy
    tb = _round_up(pl.cdiv(B, num_tiles), 8)      # balanced tiles, <8 rows pad
    bp = _round_up(B, tb)
    return tb, bp


def _critic_kernel(x_ref, w1_ref, b1_ref, w2_ref, b2_ref, w3_ref, b3_ref,
                   w4_ref, b4_ref, o_ref, *, layer1_on_vpu):
    if layer1_on_vpu:
        # Layer 1 on the VPU: K=10 unrolled rank-1 updates in f32.
        # (MXU would spend ~as many pushes here as layer 2 for ~3% of FLOPs.)
        x = x_ref[...]                      # (TB, 10) f32
        w1 = w1_ref[...]                    # (10, 400) f32
        h = b1_ref[...] + x[:, 0:1] * w1[0:1, :]
        for k in range(1, N_INPUTS):        # static unroll
            h = h + x[:, k:k + 1] * w1[k:k + 1, :]
    else:
        # MXU path (preferred on v5e): bf16 operands, f32 accumulate.
        xb = x_ref[...].astype(jnp.bfloat16)
        h = jnp.dot(xb, w1_ref[...],
                    preferred_element_type=jnp.float32) + b1_ref[...]
    h = jnp.maximum(h, 0.0)

    # Layer 2: (TB, 400) @ (400, 200), bf16 -> f32 accumulate on MXU.
    h = jnp.dot(h.astype(jnp.bfloat16), w2_ref[...],
                preferred_element_type=jnp.float32) + b2_ref[...]
    h = jnp.maximum(h, 0.0)

    # Layer 3: (TB, 200) @ (200, 200)
    h = jnp.dot(h.astype(jnp.bfloat16), w3_ref[...],
                preferred_element_type=jnp.float32) + b3_ref[...]
    h = jnp.maximum(h, 0.0)

    # Layer 4 (N=1): VPU multiply + lane reduce instead of a ~0.5%-utilized MXU
    # pass.  w4_ref is the (1, 200) transposed final weight (f32).
    out = jnp.sum(h * w4_ref[...], axis=-1, keepdims=True) + b4_ref[...]
    o_ref[...] = out.astype(o_ref.dtype)


@functools.partial(jax.jit, static_argnames=("block_b", "layer1_on_vpu"))
def ddpg_critic_forward(state, action, params, *, block_b=DEFAULT_BLOCK_B,
                        layer1_on_vpu=True):
    w1, b1, w2, b2, w3, b3, w4, b4 = params
    B = state.shape[0]
    h1, h2, h3 = NEURONS

    # concat folded into the wrapper (free / fused by XLA) -> single K=10 layer
    # in-kernel.
    x = jnp.concatenate([state.astype(jnp.float32),
                         action.astype(jnp.float32)], axis=1)

    tb, bp = _choose_tile(B, block_b)
    if bp != B:
        x = jnp.pad(x, ((0, bp - B), (0, 0)))
    grid = (bp // tb,)

    # Weight dtypes per path: f32 W1 for the VPU rank-1 path, bf16 for MXU.
    w1_in = w1.astype(jnp.float32 if layer1_on_vpu else jnp.bfloat16)
    w2b = w2.astype(jnp.bfloat16)
    w3b = w3.astype(jnp.bfloat16)
    w4r = w4.reshape(1, h3).astype(jnp.float32)

    flops = 2 * bp * (N_INPUTS * h1 + h1 * h2 + h2 * h3 + h3)
    bytes_accessed = (x.size * 4 + bp * N_OUTPUTS * 4
                      + sum(int(a.size) * a.dtype.itemsize
                            for a in (w1_in, b1, w2b, b2, w3b, b3, w4r, b4)))

    def batch_spec(shape):
        return pl.BlockSpec(shape, lambda i: (i, 0))

    def const_spec(shape):
        # Constant block index -> weights stay resident in VMEM across steps.
        return pl.BlockSpec(shape, lambda i: (0, 0))

    out = pl.pallas_call(
        functools.partial(_critic_kernel, layer1_on_vpu=layer1_on_vpu),
        out_shape=jax.ShapeDtypeStruct((bp, N_OUTPUTS), jnp.float32),
        grid=grid,
        in_specs=[
            batch_spec((tb, N_INPUTS)),                        # x tile
            const_spec((N_INPUTS, h1)), const_spec((1, h1)),   # W1, b1
            const_spec((h1, h2)),       const_spec((1, h2)),   # W2, b2
            const_spec((h2, h3)),       const_spec((1, h3)),   # W3, b3
            const_spec((1, h3)),        const_spec((1, N_OUTPUTS)),  # w4 row, b4
        ],
        out_specs=batch_spec((tb, N_OUTPUTS)),
        compiler_params=pltpu.CompilerParams(
            dimension_semantics=("parallel",),
            vmem_limit_bytes=VMEM_LIMIT_BYTES),
        cost_estimate=pl.CostEstimate(
            flops=flops, transcendentals=0, bytes_accessed=bytes_accessed),
    )(x, w1_in, b1, w2b, b2, w3b, b3, w4r, b4)

    return out[:B]


def init_params(key):
    """Deterministic init mirroring torch.nn.Linear's U(-1/sqrt(in), 1/sqrt(in))."""
    dims = [(N_INPUTS, NEURONS[0]),
            (NEURONS[0], NEURONS[1]),
            (NEURONS[1], NEURONS[2]),
            (NEURONS[2], N_OUTPUTS)]
    params = []
    keys = jax.random.split(key, 2 * len(dims))
    for i, (fan_in, fan_out) in enumerate(dims):
        bound = 1.0 / math.sqrt(fan_in)
        w = jax.random.uniform(keys[2 * i], (fan_in, fan_out),
                               minval=-bound, maxval=bound, dtype=jnp.float32)
        b = jax.random.uniform(keys[2 * i + 1], (1, fan_out),
                               minval=-bound, maxval=bound, dtype=jnp.float32)
        params += [w, b]
    return tuple(params)


def _reference_f32(state, action, params):
    """Pure f32 reference (matches the PyTorch module semantics)."""
    w1, b1, w2, b2, w3, b3, w4, b4 = params
    x = jnp.concatenate([state, action], axis=1)
    h = jax.nn.relu(x @ w1 + b1)
    h = jax.nn.relu(h @ w2 + b2)
    h = jax.nn.relu(h @ w3 + b3)
    return h @ w4 + b4


def _reference_matched(state, action, params, *, layer1_on_vpu=True):
    """Reference mirroring the kernel's per-layer numerics."""
    w1, b1, w2, b2, w3, b3, w4, b4 = params
    bf = jnp.bfloat16
    x = jnp.concatenate([state, action], axis=1)
    if layer1_on_vpu:
        h = jnp.dot(x, w1, precision=jax.lax.Precision.HIGHEST) + b1
    else:
        h = jnp.dot(x.astype(bf), w1.astype(bf),
                    preferred_element_type=jnp.float32) + b1
    h = jax.nn.relu(h)
    h = jax.nn.relu(jnp.dot(h.astype(bf), w2.astype(bf),
                            preferred_element_type=jnp.float32) + b2)
    h = jax.nn.relu(jnp.dot(h.astype(bf), w3.astype(bf),
                            preferred_element_type=jnp.float32) + b3)
    return jnp.sum(h * w4.reshape(1, -1), axis=-1, keepdims=True) + b4


if __name__ == "__main__":
    key = jax.random.PRNGKey(0)
    params = init_params(jax.random.fold_in(key, 0))

    # Cases: tiny batch / single tile; balanced multi-tile (no padding);
    # padded multi-tile; and the MXU layer-1 fallback path.
    cases = (
        (8,   DEFAULT_BLOCK_B, True),    # grid (1,)
        (144, 64,              True),    # 3 balanced tiles of 48, no padding
        (100, 64,              True),    # 2 tiles of 56, 12 rows padding
        (144, 64,              False),   # MXU layer-1 path (v5e-style)
    )
    for B, blk, vpu in cases:
        ks, ka = jax.random.split(jax.random.fold_in(key, 100 * B + int(vpu)))
        state = jax.random.normal(ks, (B, STATE_DIM), dtype=jnp.float32)
        action = jax.random.uniform(ka, (B, ACTION_DIM),
                                    minval=-1.0, maxval=1.0, dtype=jnp.float32)

        out = ddpg_critic_forward(state, action, params,
                                  block_b=blk, layer1_on_vpu=vpu)
        out = jax.block_until_ready(out)
        assert out.shape == (B, N_OUTPUTS), out.shape

        ref_m = _reference_matched(state, action, params, layer1_on_vpu=vpu)
        ref_f = _reference_f32(state, action, params)
        assert jnp.allclose(out, ref_m, atol=5e-4, rtol=5e-4), (
            "mismatch vs numerics-matched reference", B, vpu,
            float(jnp.max(jnp.abs(out - ref_m))))
        assert jnp.allclose(out, ref_f, atol=2e-2, rtol=2e-2), (
            "mismatch vs f32 reference", B, vpu,
            float(jnp.max(jnp.abs(out - ref_f))))

    print("KERNEL_OK")
</pallas_src>

<mosaic_0001>
module attributes {stable_mosaic.version = 11 : i64} {
  func.func @_critic_kernel(%arg0: i32, %arg1: memref<8x10xf32, #tpu.memory_space<vmem>>, %arg2: memref<10x400xf32, #tpu.memory_space<vmem>>, %arg3: memref<1x400xf32, #tpu.memory_space<vmem>>, %arg4: memref<400x200xbf16, #tpu.memory_space<vmem>>, %arg5: memref<1x200xf32, #tpu.memory_space<vmem>>, %arg6: memref<200x200xbf16, #tpu.memory_space<vmem>>, %arg7: memref<1x200xf32, #tpu.memory_space<vmem>>, %arg8: memref<1x200xf32, #tpu.memory_space<vmem>>, %arg9: memref<1x1xf32, #tpu.memory_space<vmem>>, %arg10: memref<8x1xf32, #tpu.memory_space<vmem>>) attributes {dimension_semantics = [#tpu.dimension_semantics<parallel>], iteration_bounds = array<i64: 1>, scalar_prefetch = 0 : i64, scratch_operands = 0 : i64, tpu.core_type = #tpu.core_type<tc>, window_params = [{transform_indices = @transform_0, window_bounds = array<i64: 8, 10>}, {pipeline_mode = #tpu.pipeline_mode<synchronous>, transform_indices = @transform_1, window_bounds = array<i64: 10, 400>}, {pipeline_mode = #tpu.pipeline_mode<synchronous>, transform_indices = @transform_2, window_bounds = array<i64: 1, 400>}, {pipeline_mode = #tpu.pipeline_mode<synchronous>, transform_indices = @transform_3, window_bounds = array<i64: 400, 200>}, {pipeline_mode = #tpu.pipeline_mode<synchronous>, transform_indices = @transform_4, window_bounds = array<i64: 1, 200>}, {pipeline_mode = #tpu.pipeline_mode<synchronous>, transform_indices = @transform_5, window_bounds = array<i64: 200, 200>}, {pipeline_mode = #tpu.pipeline_mode<synchronous>, transform_indices = @transform_6, window_bounds = array<i64: 1, 200>}, {pipeline_mode = #tpu.pipeline_mode<synchronous>, transform_indices = @transform_7, window_bounds = array<i64: 1, 200>}, {pipeline_mode = #tpu.pipeline_mode<synchronous>, transform_indices = @transform_8, window_bounds = array<i64: 1, 1>}, {transform_indices = @transform_9, window_bounds = array<i64: 8, 1>}]} {
    %c0 = arith.constant 0 : index
    %c0_0 = arith.constant 0 : index
    %0 = vector.load %arg1[%c0, %c0_0] : memref<8x10xf32, #tpu.memory_space<vmem>>, vector<8x10xf32>
    %c0_1 = arith.constant 0 : index
    %c0_2 = arith.constant 0 : index
    %1 = vector.load %arg2[%c0_1, %c0_2] : memref<10x400xf32, #tpu.memory_space<vmem>>, vector<10x400xf32>
    %c0_3 = arith.constant 0 : index
    %c0_4 = arith.constant 0 : index
    %2 = vector.load %arg3[%c0_3, %c0_4] : memref<1x400xf32, #tpu.memory_space<vmem>>, vector<1x400xf32>
    %3 = vector.extract_strided_slice %0 {offsets = [0, 0], sizes = [8, 1], strides = [1, 1]} : vector<8x10xf32> to vector<8x1xf32>
    %4 = vector.extract_strided_slice %1 {offsets = [0, 0], sizes = [1, 400], strides = [1, 1]} : vector<10x400xf32> to vector<1x400xf32>
    %5 = vector.broadcast %3 : vector<8x1xf32> to vector<8x400xf32>
    %6 = vector.broadcast %4 : vector<1x400xf32> to vector<8x400xf32>
    %7 = arith.mulf %5, %6 : vector<8x400xf32>
    %8 = vector.broadcast %2 : vector<1x400xf32> to vector<8x400xf32>
    %9 = arith.addf %8, %7 : vector<8x400xf32>
    %10 = vector.extract_strided_slice %0 {offsets = [0, 1], sizes = [8, 1], strides = [1, 1]} : vector<8x10xf32> to vector<8x1xf32>
    %11 = vector.extract_strided_slice %1 {offsets = [1, 0], sizes = [1, 400], strides = [1, 1]} : vector<10x400xf32> to vector<1x400xf32>
    %12 = vector.broadcast %10 : vector<8x1xf32> to vector<8x400xf32>
    %13 = vector.broadcast %11 : vector<1x400xf32> to vector<8x400xf32>
    %14 = arith.mulf %12, %13 : vector<8x400xf32>
    %15 = arith.addf %9, %14 : vector<8x400xf32>
    %16 = vector.extract_strided_slice %0 {offsets = [0, 2], sizes = [8, 1], strides = [1, 1]} : vector<8x10xf32> to vector<8x1xf32>
    %17 = vector.extract_strided_slice %1 {offsets = [2, 0], sizes = [1, 400], strides = [1, 1]} : vector<10x400xf32> to vector<1x400xf32>
    %18 = vector.broadcast %16 : vector<8x1xf32> to vector<8x400xf32>
    %19 = vector.broadcast %17 : vector<1x400xf32> to vector<8x400xf32>
    %20 = arith.mulf %18, %19 : vector<8x400xf32>
    %21 = arith.addf %15, %20 : vector<8x400xf32>
    %22 = vector.extract_strided_slice %0 {offsets = [0, 3], sizes = [8, 1], strides = [1, 1]} : vector<8x10xf32> to vector<8x1xf32>
    %23 = vector.extract_strided_slice %1 {offsets = [3, 0], sizes = [1, 400], strides = [1, 1]} : vector<10x400xf32> to vector<1x400xf32>
    %24 = vector.broadcast %22 : vector<8x1xf32> to vector<8x400xf32>
    %25 = vector.broadcast %23 : vector<1x400xf32> to vector<8x400xf32>
    %26 = arith.mulf %24, %25 : vector<8x400xf32>
    %27 = arith.addf %21, %26 : vector<8x400xf32>
    %28 = vector.extract_strided_slice %0 {offsets = [0, 4], sizes = [8, 1], strides = [1, 1]} : vector<8x10xf32> to vector<8x1xf32>
    %29 = vector.extract_strided_slice %1 {offsets = [4, 0], sizes = [1, 400], strides = [1, 1]} : vector<10x400xf32> to vector<1x400xf32>
    %30 = vector.broadcast %28 : vector<8x1xf32> to vector<8x400xf32>
    %31 = vector.broadcast %29 : vector<1x400xf32> to vector<8x400xf32>
    %32 = arith.mulf %30, %31 : vector<8x400xf32>
    %33 = arith.addf %27, %32 : vector<8x400xf32>
    %34 = vector.extract_strided_slice %0 {offsets = [0, 5], sizes = [8, 1], strides = [1, 1]} : vector<8x10xf32> to vector<8x1xf32>
    %35 = vector.extract_strided_slice %1 {offsets = [5, 0], sizes = [1, 400], strides = [1, 1]} : vector<10x400xf32> to vector<1x400xf32>
    %36 = vector.broadcast %34 : vector<8x1xf32> to vector<8x400xf32>
    %37 = vector.broadcast %35 : vector<1x400xf32> to vector<8x400xf32>
    %38 = arith.mulf %36, %37 : vector<8x400xf32>
    %39 = arith.addf %33, %38 : vector<8x400xf32>
    %40 = vector.extract_strided_slice %0 {offsets = [0, 6], sizes = [8, 1], strides = [1, 1]} : vector<8x10xf32> to vector<8x1xf32>
    %41 = vector.extract_strided_slice %1 {offsets = [6, 0], sizes = [1, 400], strides = [1, 1]} : vector<10x400xf32> to vector<1x400xf32>
    %42 = vector.broadcast %40 : vector<8x1xf32> to vector<8x400xf32>
    %43 = vector.broadcast %41 : vector<1x400xf32> to vector<8x400xf32>
    %44 = arith.mulf %42, %43 : vector<8x400xf32>
    %45 = arith.addf %39, %44 : vector<8x400xf32>
    %46 = vector.extract_strided_slice %0 {offsets = [0, 7], sizes = [8, 1], strides = [1, 1]} : vector<8x10xf32> to vector<8x1xf32>
    %47 = vector.extract_strided_slice %1 {offsets = [7, 0], sizes = [1, 400], strides = [1, 1]} : vector<10x400xf32> to vector<1x400xf32>
    %48 = vector.broadcast %46 : vector<8x1xf32> to vector<8x400xf32>
    %49 = vector.broadcast %47 : vector<1x400xf32> to vector<8x400xf32>
    %50 = arith.mulf %48, %49 : vector<8x400xf32>
    %51 = arith.addf %45, %50 : vector<8x400xf32>
    %52 = vector.extract_strided_slice %0 {offsets = [0, 8], sizes = [8, 1], strides = [1, 1]} : vector<8x10xf32> to vector<8x1xf32>
    %53 = vector.extract_strided_slice %1 {offsets = [8, 0], sizes = [1, 400], strides = [1, 1]} : vector<10x400xf32> to vector<1x400xf32>
    %54 = vector.broadcast %52 : vector<8x1xf32> to vector<8x400xf32>
    %55 = vector.broadcast %53 : vector<1x400xf32> to vector<8x400xf32>
    %56 = arith.mulf %54, %55 : vector<8x400xf32>
    %57 = arith.addf %51, %56 : vector<8x400xf32>
    %58 = vector.extract_strided_slice %0 {offsets = [0, 9], sizes = [8, 1], strides = [1, 1]} : vector<8x10xf32> to vector<8x1xf32>
    %59 = vector.extract_strided_slice %1 {offsets = [9, 0], sizes = [1, 400], strides = [1, 1]} : vector<10x400xf32> to vector<1x400xf32>
    %60 = vector.broadcast %58 : vector<8x1xf32> to vector<8x400xf32>
    %61 = vector.broadcast %59 : vector<1x400xf32> to vector<8x400xf32>
    %62 = arith.mulf %60, %61 : vector<8x400xf32>
    %63 = arith.addf %57, %62 : vector<8x400xf32>
    %cst = arith.constant 0.000000e+00 : f32
    %64 = vector.broadcast %cst : f32 to vector<8x400xf32>
    %65 = arith.maximumf %63, %64 : vector<8x400xf32>
    %66 = arith.truncf %65 : vector<8x400xf32> to vector<8x400xbf16>
    %c0_5 = arith.constant 0 : index
    %c0_6 = arith.constant 0 : index
    %67 = vector.load %arg4[%c0_5, %c0_6] : memref<400x200xbf16, #tpu.memory_space<vmem>>, vector<400x200xbf16>
    %cst_7 = arith.constant dense<0.000000e+00> : vector<8x200xf32>
    %68 = tpu.matmul %66, %67, %cst_7 {dimension_numbers = #tpu.dot_dimension_numbers<[1], [0], [0], [1], [0, 0, 1, 1], [], []>} : vector<8x400xbf16>, vector<400x200xbf16>, vector<8x200xf32> -> vector<8x200xf32>
    %c0_8 = arith.constant 0 : index
    %c0_9 = arith.constant 0 : index
    %69 = vector.load %arg5[%c0_8, %c0_9] : memref<1x200xf32, #tpu.memory_space<vmem>>, vector<1x200xf32>
    %70 = vector.broadcast %69 : vector<1x200xf32> to vector<8x200xf32>
    %71 = arith.addf %68, %70 : vector<8x200xf32>
    %cst_10 = arith.constant 0.000000e+00 : f32
    %72 = vector.broadcast %cst_10 : f32 to vector<8x200xf32>
    %73 = arith.maximumf %71, %72 : vector<8x200xf32>
    %74 = arith.truncf %73 : vector<8x200xf32> to vector<8x200xbf16>
    %c0_11 = arith.constant 0 : index
    %c0_12 = arith.constant 0 : index
    %75 = vector.load %arg6[%c0_11, %c0_12] : memref<200x200xbf16, #tpu.memory_space<vmem>>, vector<200x200xbf16>
    %cst_13 = arith.constant dense<0.000000e+00> : vector<8x200xf32>
    %76 = tpu.matmul %74, %75, %cst_13 {dimension_numbers = #tpu.dot_dimension_numbers<[1], [0], [0], [1], [0, 0, 1, 1], [], []>} : vector<8x200xbf16>, vector<200x200xbf16>, vector<8x200xf32> -> vector<8x200xf32>
    %c0_14 = arith.constant 0 : index
    %c0_15 = arith.constant 0 : index
    %77 = vector.load %arg7[%c0_14, %c0_15] : memref<1x200xf32, #tpu.memory_space<vmem>>, vector<1x200xf32>
    %78 = vector.broadcast %77 : vector<1x200xf32> to vector<8x200xf32>
    %79 = arith.addf %76, %78 : vector<8x200xf32>
    %cst_16 = arith.constant 0.000000e+00 : f32
    %80 = vector.broadcast %cst_16 : f32 to vector<8x200xf32>
    %81 = arith.maximumf %79, %80 : vector<8x200xf32>
    %c0_17 = arith.constant 0 : index
    %c0_18 = arith.constant 0 : index
    %82 = vector.load %arg8[%c0_17, %c0_18] : memref<1x200xf32, #tpu.memory_space<vmem>>, vector<1x200xf32>
    %83 = vector.broadcast %82 : vector<1x200xf32> to vector<8x200xf32>
    %84 = arith.mulf %81, %83 : vector<8x200xf32>
    %cst_19 = arith.constant dense<0.000000e+00> : vector<8xf32>
    %85 = vector.multi_reduction <add>, %84, %cst_19 [1] : vector<8x200xf32> to vector<8xf32>
    %86 = vector.shape_cast %85 : vector<8xf32> to vector<8x1xf32>
    %c0_20 = arith.constant 0 : index
    %c0_21 = arith.constant 0 : index
    %87 = vector.load %arg9[%c0_20, %c0_21] : memref<1x1xf32, #tpu.memory_space<vmem>>, vector<1x1xf32>
    %88 = vector.broadcast %87 : vector<1x1xf32> to vector<8x1xf32>
    %89 = arith.addf %86, %88 : vector<8x1xf32>
    %c0_22 = arith.constant 0 : index
    %c0_23 = arith.constant 0 : index
    %90 = vector.load %arg10[%c0_22, %c0_23] : memref<8x1xf32, #tpu.memory_space<vmem>>, vector<8x1xf32>
    tpu.vector_store %arg10[%c0_22, %c0_23], %89 {strides = array<i32>} : memref<8x1xf32, #tpu.memory_space<vmem>>, vector<8x1xf32>,
    return
  }
  func.func @transform_0(%arg0: i32) -> (i32, i32) {
    %c0_i32 = arith.constant 0 : i32
    %c0_i32_0 = arith.constant 0 : i32
    return %arg0, %c0_i32 : i32, i32
  }
  func.func @transform_1(%arg0: i32) -> (i32, i32) {
    %c0_i32 = arith.constant 0 : i32
    %c0_i32_0 = arith.constant 0 : i32
    %c0_i32_1 = arith.constant 0 : i32
    return %c0_i32, %c0_i32_0 : i32, i32
  }
  func.func @transform_2(%arg0: i32) -> (i32, i32) {
    %c0_i32 = arith.constant 0 : i32
    %c0_i32_0 = arith.constant 0 : i32
    %c0_i32_1 = arith.constant 0 : i32
    return %c0_i32, %c0_i32_0 : i32, i32
  }
  func.func @transform_3(%arg0: i32) -> (i32, i32) {
    %c0_i32 = arith.constant 0 : i32
    %c0_i32_0 = arith.constant 0 : i32
    %c0_i32_1 = arith.constant 0 : i32
    return %c0_i32, %c0_i32_0 : i32, i32
  }
  func.func @transform_4(%arg0: i32) -> (i32, i32) {
    %c0_i32 = arith.constant 0 : i32
    %c0_i32_0 = arith.constant 0 : i32
    %c0_i32_1 = arith.constant 0 : i32
    return %c0_i32, %c0_i32_0 : i32, i32
  }
  func.func @transform_5(%arg0: i32) -> (i32, i32) {
    %c0_i32 = arith.constant 0 : i32
    %c0_i32_0 = arith.constant 0 : i32
    %c0_i32_1 = arith.constant 0 : i32
    return %c0_i32, %c0_i32_0 : i32, i32
  }
  func.func @transform_6(%arg0: i32) -> (i32, i32) {
    %c0_i32 = arith.constant 0 : i32
    %c0_i32_0 = arith.constant 0 : i32
    %c0_i32_1 = arith.constant 0 : i32
    return %c0_i32, %c0_i32_0 : i32, i32
  }
  func.func @transform_7(%arg0: i32) -> (i32, i32) {
    %c0_i32 = arith.constant 0 : i32
    %c0_i32_0 = arith.constant 0 : i32
    %c0_i32_1 = arith.constant 0 : i32
    return %c0_i32, %c0_i32_0 : i32, i32
  }
  func.func @transform_8(%arg0: i32) -> (i32, i32) {
    %c0_i32 = arith.constant 0 : i32
    %c0_i32_0 = arith.constant 0 : i32
    %c0_i32_1 = arith.constant 0 : i32
    return %c0_i32, %c0_i32_0 : i32, i32
  }
  func.func @transform_9(%arg0: i32) -> (i32, i32) {
    %c0_i32 = arith.constant 0 : i32
    %c0_i32_0 = arith.constant 0 : i32
    return %arg0, %c0_i32 : i32, i32
  }
}

</mosaic_0001>

<llo_original>
// kernel: ddpg_critic_forward.1
$region0: #{ddpg_critic_forward.1}
  #allocation0 [shape = 'u32[]', space=smem, size = 0x4, offset = 0x4, fixed_abs, tag = 'smem constant byte address 0x4 - core index']
  #allocation1 [shape = 'u32[144,128]{1,0:T(1,128)}', space=vmem, size = 0x12000, scoped, tag = 'internal scratch']
  #allocation2 [shape = 'f32[1,1]{1,0:T(1,128)S(1)}', space=vmem, size = 0x200, scoped, tag = 'scoped memory for ddpg_critic_forward.1']
  %s0 = inlined_call_operand.vmem [shape: f32[8,10], index: 0, kind: input, shape index: {}]
  %s1 = inlined_call_operand.vmem [shape: f32[10,400], index: 1, kind: input, shape index: {}]
  %s2 = inlined_call_operand.vmem [shape: f32[1,400], index: 2, kind: input, shape index: {}]
  %s3 = inlined_call_operand.vmem [shape: bf16[400,200], index: 3, kind: input, shape index: {}]
  %s4 = inlined_call_operand.vmem [shape: f32[1,200], index: 4, kind: input, shape index: {}]
  %s5 = inlined_call_operand.vmem [shape: bf16[200,200], index: 5, kind: input, shape index: {}]
  %s6 = inlined_call_operand.vmem [shape: f32[1,200], index: 6, kind: input, shape index: {}]
  %s7 = inlined_call_operand.vmem [shape: f32[1,200], index: 7, kind: input, shape index: {}]
  %s8 = inlined_call_operand.<no memory space> [shape: f32[1,1], index: 8, kind: input, shape index: {}]
  %s9 = inlined_call_operand.vmem [shape: f32[8,1], index: 9, kind: output, shape index: {}]
  %s10 = sld [smem:[#allocation0]]
  $region46: #{ddpg_critic_forward.1} parent=0
    _
  %s12 = ssub.s32 1, %s10
  %s13 = scalar_select 0, %s12, %s10
  %v14 = vstv %s8
  %15 = vst [vmem:[#allocation2] sm:$0x1] %v14
  // Predicated region
  $region2: #{ddpg_critic_forward.1} parent=0 // pred_check
    _
  $region3: #{ddpg_critic_forward.1} parent=0 // pred_check_branch
    %17 = sbr.rel (0) target = $region5
  $region4: #{ddpg_critic_forward.1} parent=0 // pred_region
    _
  $region5: #{ddpg_critic_forward.1} parent=0 // pred_fallthru
    _
  // Predicated region
  $region6: #{ddpg_critic_forward.1} parent=0 // pred_check
    _
  $region7: #{ddpg_critic_forward.1} parent=0 // pred_check_branch
    %19 = sbr.rel (0) target = $region9
  $region8: #{ddpg_critic_forward.1} parent=0 // pred_region
    _
  $region9: #{ddpg_critic_forward.1} parent=0 // pred_fallthru
    _
  // Predicated region
  $region10: #{ddpg_critic_forward.1} parent=0 // pred_check
    _
  $region11: #{ddpg_critic_forward.1} parent=0 // pred_check_branch
    %21 = sbr.rel (0) target = $region13
  $region12: #{ddpg_critic_forward.1} parent=0 // pred_region
    _
  $region13: #{ddpg_critic_forward.1} parent=0 // pred_fallthru
    _
  // Predicated region
  $region14: #{ddpg_critic_forward.1} parent=0 // pred_check
    _
  $region15: #{ddpg_critic_forward.1} parent=0 // pred_check_branch
    %23 = sbr.rel (0) target = $region17
  $region16: #{ddpg_critic_forward.1} parent=0 // pred_region
    _
  $region17: #{ddpg_critic_forward.1} parent=0 // pred_fallthru
    _
  // Predicated region
  $region18: #{ddpg_critic_forward.1} parent=0 // pred_check
    _
  $region19: #{ddpg_critic_forward.1} parent=0 // pred_check_branch
    %25 = sbr.rel (0) target = $region21
  $region20: #{ddpg_critic_forward.1} parent=0 // pred_region
    _
  $region21: #{ddpg_critic_forward.1} parent=0 // pred_fallthru
    _
  // Predicated region
  $region22: #{ddpg_critic_forward.1} parent=0 // pred_check
    _
  $region23: #{ddpg_critic_forward.1} parent=0 // pred_check_branch
    %27 = sbr.rel (0) target = $region25
  $region24: #{ddpg_critic_forward.1} parent=0 // pred_region
    _
  $region25: #{ddpg_critic_forward.1} parent=0 // pred_fallthru
    _
  // Predicated region
  $region26: #{ddpg_critic_forward.1} parent=0 // pred_check
    _
  $region27: #{ddpg_critic_forward.1} parent=0 // pred_check_branch
    %29 = sbr.rel (0) target = $region29
  $region28: #{ddpg_critic_forward.1} parent=0 // pred_region
    _
  $region29: #{ddpg_critic_forward.1} parent=0 // pred_fallthru
    _
  // Predicated region
  $region30: #{ddpg_critic_forward.1} parent=0 // pred_check
    _
  $region31: #{ddpg_critic_forward.1} parent=0 // pred_check_branch
    %31 = sbr.rel (0) target = $region33
  $region32: #{ddpg_critic_forward.1} parent=0 // pred_region
    _
  $region33: #{ddpg_critic_forward.1} parent=0 // pred_fallthru
    _
  // Predicated region
  $region34: #{ddpg_critic_forward.1} parent=0 // pred_check
    _
  $region35: #{ddpg_critic_forward.1} parent=0 // pred_check_branch
    %33 = sbr.rel (0) target = $region37
  $region36: #{ddpg_critic_forward.1} parent=0 // pred_region
    _
  $region37: #{ddpg_critic_forward.1} parent=0 // pred_fallthru
    _
  %v35 = vld [vmem:[%s0] sm:$0xff]
  %v36 = vld [vmem:[%s1] sm:$0xff]
  %v37 = vld [vmem:[%s1 + $0x8] sm:$0xff]
  %v38 = vld [vmem:[%s1 + $0x10] sm:$0xff]
  %v39 = vld [vmem:[%s1 + $0x18] sm:$0xff]
  %v40 = vld [vmem:[%s1 + $0x20] sm:$0x3]
  %v41 = vld [vmem:[%s1 + $0x28] sm:$0x3]
  %v42 = vld [vmem:[%s1 + $0x30] sm:$0x3]
  %v43 = vld [vmem:[%s1 + $0x38] sm:$0x3]
  %v44 = vld [vmem:[%s2] sm:$0xf]
  %46 = vset.pattern.permute.xlu0 0
  %47 = vperm.xlu0 %46, %v35
  %v48 = vpop.permute.xlu0 %47
  %v50 = vlaneseq
  %v51 = vshrl.u32 %v50, 7
  %v52 = vsub.s32 0, %v51
  %v53 = vrot.slane %v36, %v52
  %v54 = vlaneseq
  %v55 = vshrl.u32 %v54, 7
  %v56 = vsub.s32 0, %v55
  %v57 = vrot.slane %v37, %v56
  %v58 = vlaneseq
  %v59 = vshrl.u32 %v58, 7
  %v60 = vsub.s32 0, %v59
  %v61 = vrot.slane %v38, %v60
  %v62 = vlaneseq
  %v63 = vshrl.u32 %v62, 7
  %v64 = vsub.s32 0, %v63
  %v65 = vrot.slane %v39, %v64
  %v66 = vmul.f32 %v48, %v53
  %v67 = vmul.f32 %v48, %v57
  %v68 = vmul.f32 %v48, %v61
  %v69 = vmul.f32 %v48, %v65
  %v71 = vlaneseq
  %v72 = vshrl.u32 %v71, 7
  %v73 = vsub.s32 0, %v72
  %v74 = vrot.slane %v44, %v73
  %v75 = vlaneseq
  %v76 = vshrl.u32 %v75, 7
  %v77 = vsub.s32 1, %v76
  %v78 = vrot.slane %v44, %v77
  %v79 = vlaneseq
  %v80 = vshrl.u32 %v79, 7
  %v81 = vsub.s32 2, %v80
  %v82 = vrot.slane %v44, %v81
  %v83 = vlaneseq
  %v84 = vshrl.u32 %v83, 7
  %v85 = vsub.s32 3, %v84
  %v86 = vrot.slane %v44, %v85
  %v91 = vadd.f32 %v74, %v66
  %v92 = vadd.f32 %v78, %v67
  %v93 = vadd.f32 %v82, %v68
  %v94 = vadd.f32 %v86, %v69
  %95 = vset.pattern.permute.xlu0 1
  %96 = vperm.xlu0 %95, %v35
  %v97 = vpop.permute.xlu0 %96
  %v99 = vlaneseq
  %v100 = vshrl.u32 %v99, 7
  %v101 = vsub.s32 1, %v100
  %v102 = vrot.slane %v36, %v101
  %v103 = vlaneseq
  %v104 = vshrl.u32 %v103, 7
  %v105 = vsub.s32 1, %v104
  %v106 = vrot.slane %v37, %v105
  %v107 = vlaneseq
  %v108 = vshrl.u32 %v107, 7
  %v109 = vsub.s32 1, %v108
  %v110 = vrot.slane %v38, %v109
  %v111 = vlaneseq
  %v112 = vshrl.u32 %v111, 7
  %v113 = vsub.s32 1, %v112
  %v114 = vrot.slane %v39, %v113
  %v115 = vmul.f32 %v97, %v102
  %v116 = vmul.f32 %v97, %v106
  %v117 = vmul.f32 %v97, %v110
  %v118 = vmul.f32 %v97, %v114
  %v119 = vadd.f32 %v91, %v115
  %v120 = vadd.f32 %v92, %v116
  %v121 = vadd.f32 %v93, %v117
  %v122 = vadd.f32 %v94, %v118
  %123 = vset.pattern.permute.xlu0 2
  %124 = vperm.xlu0 %123, %v35
  %v125 = vpop.permute.xlu0 %124
  %v127 = vlaneseq
  %v128 = vshrl.u32 %v127, 7
  %v129 = vsub.s32 2, %v128
  %v130 = vrot.slane %v36, %v129
  %v131 = vlaneseq
  %v132 = vshrl.u32 %v131, 7
  %v133 = vsub.s32 2, %v132
  %v134 = vrot.slane %v37, %v133
  %v135 = vlaneseq
  %v136 = vshrl.u32 %v135, 7
  %v137 = vsub.s32 2, %v136
  %v138 = vrot.slane %v38, %v137
  %v139 = vlaneseq
  %v140 = vshrl.u32 %v139, 7
  %v141 = vsub.s32 2, %v140
  %v142 = vrot.slane %v39, %v141
  %v143 = vmul.f32 %v125, %v130
  %v144 = vmul.f32 %v125, %v134
  %v145 = vmul.f32 %v125, %v138
  %v146 = vmul.f32 %v125, %v142
  %v147 = vadd.f32 %v119, %v143
  %v148 = vadd.f32 %v120, %v144
  %v149 = vadd.f32 %v121, %v145
  %v150 = vadd.f32 %v122, %v146
  %151 = vset.pattern.permute.xlu0 3
  %152 = vperm.xlu0 %151, %v35
  %v153 = vpop.permute.xlu0 %152
  %v155 = vlaneseq
  %v156 = vshrl.u32 %v155, 7
  %v157 = vsub.s32 3, %v156
  %v158 = vrot.slane %v36, %v157
  %v159 = vlaneseq
  %v160 = vshrl.u32 %v159, 7
  %v161 = vsub.s32 3, %v160
  %v162 = vrot.slane %v37, %v161
  %v163 = vlaneseq
  %v164 = vshrl.u32 %v163, 7
  %v165 = vsub.s32 3, %v164
  %v166 = vrot.slane %v38, %v165
  %v167 = vlaneseq
  %v168 = vshrl.u32 %v167, 7
  %v169 = vsub.s32 3, %v168
  %v170 = vrot.slane %v39, %v169
  %v171 = vmul.f32 %v153, %v158
  %v172 = vmul.f32 %v153, %v162
  %v173 = vmul.f32 %v153, %v166
  %v174 = vmul.f32 %v153, %v170
  %v175 = vadd.f32 %v147, %v171
  %v176 = vadd.f32 %v148, %v172
  %v177 = vadd.f32 %v149, %v173
  %v178 = vadd.f32 %v150, %v174
  %179 = vset.pattern.permute.xlu0 4
  %180 = vperm.xlu0 %179, %v35
  %v181 = vpop.permute.xlu0 %180
  %v183 = vlaneseq
  %v184 = vshrl.u32 %v183, 7
  %v185 = vsub.s32 4, %v184
  %v186 = vrot.slane %v36, %v185
  %v187 = vlaneseq
  %v188 = vshrl.u32 %v187, 7
  %v189 = vsub.s32 4, %v188
  %v190 = vrot.slane %v37, %v189
  %v191 = vlaneseq
  %v192 = vshrl.u32 %v191, 7
  %v193 = vsub.s32 4, %v192
  %v194 = vrot.slane %v38, %v193
  %v195 = vlaneseq
  %v196 = vshrl.u32 %v195, 7
  %v197 = vsub.s32 4, %v196
  %v198 = vrot.slane %v39, %v197
  %v199 = vmul.f32 %v181, %v186
  %v200 = vmul.f32 %v181, %v190
  %v201 = vmul.f32 %v181, %v194
  %v202 = vmul.f32 %v181, %v198
  %v203 = vadd.f32 %v175, %v199
  %v204 = vadd.f32 %v176, %v200
  %v205 = vadd.f32 %v177, %v201
  %v206 = vadd.f32 %v178, %v202
  %207 = vset.pattern.permute.xlu0 5
  %208 = vperm.xlu0 %207, %v35
  %v209 = vpop.permute.xlu0 %208
  %v211 = vlaneseq
  %v212 = vshrl.u32 %v211, 7
  %v213 = vsub.s32 5, %v212
  %v214 = vrot.slane %v36, %v213
  %v215 = vlaneseq
  %v216 = vshrl.u32 %v215, 7
  %v217 = vsub.s32 5, %v216
  %v218 = vrot.slane %v37, %v217
  %v219 = vlaneseq
  %v220 = vshrl.u32 %v219, 7
  %v221 = vsub.s32 5, %v220
  %v222 = vrot.slane %v38, %v221
  %v223 = vlaneseq
  %v224 = vshrl.u32 %v223, 7
  %v225 = vsub.s32 5, %v224
  %v226 = vrot.slane %v39, %v225
  %v227 = vmul.f32 %v209, %v214
  %v228 = vmul.f32 %v209, %v218
  %v229 = vmul.f32 %v209, %v222
  %v230 = vmul.f32 %v209, %v226
  %v231 = vadd.f32 %v203, %v227
  %v232 = vadd.f32 %v204, %v228
  %v233 = vadd.f32 %v205, %v229
  %v234 = vadd.f32 %v206, %v230
  %235 = vset.pattern.permute.xlu0 6
  %236 = vperm.xlu0 %235, %v35
  %v237 = vpop.permute.xlu0 %236
  %v239 = vlaneseq
  %v240 = vshrl.u32 %v239, 7
  %v241 = vsub.s32 6, %v240
  %v242 = vrot.slane %v36, %v241
  %v243 = vlaneseq
  %v244 = vshrl.u32 %v243, 7
  %v245 = vsub.s32 6, %v244
  %v246 = vrot.slane %v37, %v245
  %v247 = vlaneseq
  %v248 = vshrl.u32 %v247, 7
  %v249 = vsub.s32 6, %v248
  %v250 = vrot.slane %v38, %v249
  %v251 = vlaneseq
  %v252 = vshrl.u32 %v251, 7
  %v253 = vsub.s32 6, %v252
  %v254 = vrot.slane %v39, %v253
  %v255 = vmul.f32 %v237, %v242
  %v256 = vmul.f32 %v237, %v246
  %v257 = vmul.f32 %v237, %v250
  %v258 = vmul.f32 %v237, %v254
  %v259 = vadd.f32 %v231, %v255
  %v260 = vadd.f32 %v232, %v256
  %v261 = vadd.f32 %v233, %v257
  %v262 = vadd.f32 %v234, %v258
  %263 = vset.pattern.permute.xlu0 7
  %264 = vperm.xlu0 %263, %v35
  %v265 = vpop.permute.xlu0 %264
  %v267 = vlaneseq
  %v268 = vshrl.u32 %v267, 7
  %v269 = vsub.s32 7, %v268
  %v270 = vrot.slane %v36, %v269
  %v271 = vlaneseq
  %v272 = vshrl.u32 %v271, 7
  %v273 = vsub.s32 7, %v272
  %v274 = vrot.slane %v37, %v273
  %v275 = vlaneseq
  %v276 = vshrl.u32 %v275, 7
  %v277 = vsub.s32 7, %v276
  %v278 = vrot.slane %v38, %v277
  %v279 = vlaneseq
  %v280 = vshrl.u32 %v279, 7
  %v281 = vsub.s32 7, %v280
  %v282 = vrot.slane %v39, %v281
  %v283 = vmul.f32 %v265, %v270
  %v284 = vmul.f32 %v265, %v274
  %v285 = vmul.f32 %v265, %v278
  %v286 = vmul.f32 %v265, %v282
  %v287 = vadd.f32 %v259, %v283
  %v288 = vadd.f32 %v260, %v284
  %v289 = vadd.f32 %v261, %v285
  %v290 = vadd.f32 %v262, %v286
  %291 = vset.pattern.permute.xlu0 8
  %292 = vperm.xlu0 %291, %v35
  %v293 = vpop.permute.xlu0 %292
  %v295 = vlaneseq
  %v296 = vshrl.u32 %v295, 7
  %v297 = vsub.s32 0, %v296
  %v298 = vrot.slane %v40, %v297
  %v299 = vlaneseq
  %v300 = vshrl.u32 %v299, 7
  %v301 = vsub.s32 0, %v300
  %v302 = vrot.slane %v41, %v301
  %v303 = vlaneseq
  %v304 = vshrl.u32 %v303, 7
  %v305 = vsub.s32 0, %v304
  %v306 = vrot.slane %v42, %v305
  %v307 = vlaneseq
  %v308 = vshrl.u32 %v307, 7
  %v309 = vsub.s32 0, %v308
  %v310 = vrot.slane %v43, %v309
  %v311 = vmul.f32 %v293, %v298
  %v312 = vmul.f32 %v293, %v302
  %v313 = vmul.f32 %v293, %v306
  %v314 = vmul.f32 %v293, %v310
  %v315 = vadd.f32 %v287, %v311
  %v316 = vadd.f32 %v288, %v312
  %v317 = vadd.f32 %v289, %v313
  %v318 = vadd.f32 %v290, %v314
  %319 = vset.pattern.permute.xlu0 9
  %320 = vperm.xlu0 %319, %v35
  %v321 = vpop.permute.xlu0 %320
  %v323 = vlaneseq
  %v324 = vshrl.u32 %v323, 7
  %v325 = vsub.s32 1, %v324
  %v326 = vrot.slane %v40, %v325
  %v327 = vlaneseq
  %v328 = vshrl.u32 %v327, 7
  %v329 = vsub.s32 1, %v328
  %v330 = vrot.slane %v41, %v329
  %v331 = vlaneseq
  %v332 = vshrl.u32 %v331, 7
  %v333 = vsub.s32 1, %v332
  %v334 = vrot.slane %v42, %v333
  %v335 = vlaneseq
  %v336 = vshrl.u32 %v335, 7
  %v337 = vsub.s32 1, %v336
  %v338 = vrot.slane %v43, %v337
  %v339 = vmul.f32 %v321, %v326
  %v340 = vmul.f32 %v321, %v330
  %v341 = vmul.f32 %v321, %v334
  %v342 = vmul.f32 %v321, %v338
  %v343 = vadd.f32 %v315, %v339
  %v344 = vadd.f32 %v316, %v340
  %v345 = vadd.f32 %v317, %v341
  %v346 = vadd.f32 %v318, %v342
  %v347 = vmax.f32 %v343, 0.0
  %v348 = vmax.f32 %v344, 0.0
  %v349 = vmax.f32 %v345, 0.0
  %v350 = vmax.f32 %v346, 0.0
  %v351 = vpack.c.bf16 %v347, %v347
  %v352 = vpack.c.bf16 %v348, %v348
  %v353 = vpack.c.bf16 %v349, %v349
  %v354 = vpack.c.bf16 %v350, %v350
  %v355 = vld [vmem:[%s3] sm:$0xff]
  %v356 = vld [vmem:[%s3 + $0x8] sm:$0xff]
  %v357 = vld [vmem:[%s3 + $0x10] sm:$0xff]
  %v358 = vld [vmem:[%s3 + $0x18] sm:$0xff]
  %v359 = vld [vmem:[%s3 + $0x20] sm:$0xff]
  %v360 = vld [vmem:[%s3 + $0x28] sm:$0xff]
  %v361 = vld [vmem:[%s3 + $0x30] sm:$0xff]
  %v362 = vld [vmem:[%s3 + $0x38] sm:$0xff]
  %v363 = vld [vmem:[%s3 + $0x40] sm:$0xff]
  %v364 = vld [vmem:[%s3 + $0x48] sm:$0xff]
  %v365 = vld [vmem:[%s3 + $0x50] sm:$0xff]
  %v366 = vld [vmem:[%s3 + $0x58] sm:$0xff]
  %v367 = vld [vmem:[%s3 + $0x60] sm:$0xff]
  %v368 = vld [vmem:[%s3 + $0x68] sm:$0xff]
  %v369 = vld [vmem:[%s3 + $0x70] sm:$0xff]
  %v370 = vld [vmem:[%s3 + $0x78] sm:$0xff]
  %v371 = vld [vmem:[%s3 + $0x80] sm:$0xff]
  %v372 = vld [vmem:[%s3 + $0x88] sm:$0xff]
  %v373 = vld [vmem:[%s3 + $0x90] sm:$0xff]
  %v374 = vld [vmem:[%s3 + $0x98] sm:$0xff]
  %v375 = vld [vmem:[%s3 + $0xa0] sm:$0xff]
  %v376 = vld [vmem:[%s3 + $0xa8] sm:$0xff]
  %v377 = vld [vmem:[%s3 + $0xb0] sm:$0xff]
  %v378 = vld [vmem:[%s3 + $0xb8] sm:$0xff]
  %v379 = vld [vmem:[%s3 + $0xc0] sm:$0xff]
  %v380 = vld [vmem:[%s3 + $0xc8] sm:$0xff]
  %v381 = vld [vmem:[%s3 + $0xd0] sm:$0xff]
  %v382 = vld [vmem:[%s3 + $0xd8] sm:$0xff]
  %v383 = vld [vmem:[%s3 + $0xe0] sm:$0xff]
  %v384 = vld [vmem:[%s3 + $0xe8] sm:$0xff]
  %v385 = vld [vmem:[%s3 + $0xf0] sm:$0xff]
  %v386 = vld [vmem:[%s3 + $0xf8] sm:$0xff]
  %v387 = vld [vmem:[%s3 + $0x100] sm:$0xff]
  %v388 = vld [vmem:[%s3 + $0x108] sm:$0xff]
  %v389 = vld [vmem:[%s3 + $0x110] sm:$0xff]
  %v390 = vld [vmem:[%s3 + $0x118] sm:$0xff]
  %v391 = vld [vmem:[%s3 + $0x120] sm:$0xff]
  %v392 = vld [vmem:[%s3 + $0x128] sm:$0xff]
  %v393 = vld [vmem:[%s3 + $0x130] sm:$0xff]
  %v394 = vld [vmem:[%s3 + $0x138] sm:$0xff]
  %v395 = vld [vmem:[%s3 + $0x140] sm:$0xff]
  %v396 = vld [vmem:[%s3 + $0x148] sm:$0xff]
  %v397 = vld [vmem:[%s3 + $0x150] sm:$0xff]
  %v398 = vld [vmem:[%s3 + $0x158] sm:$0xff]
  %v399 = vld [vmem:[%s3 + $0x160] sm:$0xff]
  %v400 = vld [vmem:[%s3 + $0x168] sm:$0xff]
  %v401 = vld [vmem:[%s3 + $0x170] sm:$0xff]
  %v402 = vld [vmem:[%s3 + $0x178] sm:$0xff]
  %v403 = vld [vmem:[%s3 + $0x180] sm:$0xff]
  %v404 = vld [vmem:[%s3 + $0x188] sm:$0xff]
  %v405 = vld [vmem:[%s4] sm:$0x3]
  %v407 = vlaneseq
  %v408 = vshrl.u32 %v407, 7
  %v409 = vsub.s32 0, %v408
  %v410 = vrot.slane %v405, %v409
  %v411 = vlaneseq
  %v412 = vshrl.u32 %v411, 7
  %v413 = vsub.s32 1, %v412
  %v414 = vrot.slane %v405, %v413
  %v467 = vunpack.c.l.b16 %v355
  %v468 = vunpack.c.h.b16 %v355
  %v469 = vunpack.c.l.b16 %v356
  %v470 = vunpack.c.h.b16 %v356
  %v471 = vunpack.c.l.b16 %v357
  %v472 = vunpack.c.h.b16 %v357
  %v473 = vunpack.c.l.b16 %v358
  %v474 = vunpack.c.h.b16 %v358
  %v475 = vunpack.c.l.b16 %v359
  %v476 = vunpack.c.h.b16 %v359
  %v477 = vunpack.c.l.b16 %v360
  %v478 = vunpack.c.h.b16 %v360
  %v479 = vunpack.c.l.b16 %v361
  %v480 = vunpack.c.h.b16 %v361
  %v481 = vunpack.c.l.b16 %v362
  %v482 = vunpack.c.h.b16 %v362
  %v483 = vunpack.c.l.b16 %v363
  %v484 = vunpack.c.h.b16 %v363
  %v485 = vunpack.c.l.b16 %v364
  %v486 = vunpack.c.h.b16 %v364
  %v487 = vunpack.c.l.b16 %v365
  %v488 = vunpack.c.h.b16 %v365
  %v489 = vunpack.c.l.b16 %v366
  %v490 = vunpack.c.h.b16 %v366
  %v491 = vunpack.c.l.b16 %v367
  %v492 = vunpack.c.h.b16 %v367
  %v493 = vunpack.c.l.b16 %v368
  %v494 = vunpack.c.h.b16 %v368
  %v495 = vunpack.c.l.b16 %v369
  %v496 = vunpack.c.h.b16 %v369
  %v497 = vunpack.c.l.b16 %v370
  %v498 = vunpack.c.h.b16 %v370
  %v499 = vunpack.c.l.b16 %v371
  %v500 = vunpack.c.h.b16 %v371
  %v501 = vunpack.c.l.b16 %v372
  %v502 = vunpack.c.h.b16 %v372
  %v503 = vunpack.c.l.b16 %v373
  %v504 = vunpack.c.h.b16 %v373
  %v505 = vunpack.c.l.b16 %v374
  %v506 = vunpack.c.h.b16 %v374
  %v507 = vunpack.c.l.b16 %v375
  %v508 = vunpack.c.h.b16 %v375
  %v509 = vunpack.c.l.b16 %v376
  %v510 = vunpack.c.h.b16 %v376
  %v511 = vunpack.c.l.b16 %v377
  %v512 = vunpack.c.h.b16 %v377
  %v513 = vunpack.c.l.b16 %v378
  %v514 = vunpack.c.h.b16 %v378
  %v515 = vunpack.c.l.b16 %v379
  %v516 = vunpack.c.h.b16 %v379
  %v517 = vunpack.c.l.b16 %v380
  %v518 = vunpack.c.h.b16 %v380
  %v519 = vunpack.c.l.b16 %v381
  %v520 = vunpack.c.h.b16 %v381
  %v521 = vunpack.c.l.b16 %v382
  %v522 = vunpack.c.h.b16 %v382
  %v523 = vunpack.c.l.b16 %v383
  %v524 = vunpack.c.h.b16 %v383
  %v525 = vunpack.c.l.b16 %v384
  %v526 = vunpack.c.h.b16 %v384
  %v527 = vunpack.c.l.b16 %v385
  %v528 = vunpack.c.h.b16 %v385
  %v529 = vunpack.c.l.b16 %v386
  %v530 = vunpack.c.h.b16 %v386
  %v531 = vunpack.c.l.b16 %v387
  %v532 = vunpack.c.h.b16 %v387
  %v533 = vunpack.c.l.b16 %v388
  %v534 = vunpack.c.h.b16 %v388
  %v535 = vunpack.c.l.b16 %v389
  %v536 = vunpack.c.h.b16 %v389
  %v537 = vunpack.c.l.b16 %v390
  %v538 = vunpack.c.h.b16 %v390
  %v539 = vunpack.c.l.b16 %v391
  %v540 = vunpack.c.h.b16 %v391
  %v541 = vunpack.c.l.b16 %v392
  %v542 = vunpack.c.h.b16 %v392
  %v543 = vunpack.c.l.b16 %v393
  %v544 = vunpack.c.h.b16 %v393
  %v545 = vunpack.c.l.b16 %v394
  %v546 = vunpack.c.h.b16 %v394
  %v547 = vunpack.c.l.b16 %v395
  %v548 = vunpack.c.h.b16 %v395
  %v549 = vunpack.c.l.b16 %v396
  %v550 = vunpack.c.h.b16 %v396
  %v551 = vunpack.c.l.b16 %v397
  %v552 = vunpack.c.h.b16 %v397
  %v553 = vunpack.c.l.b16 %v398
  %v554 = vunpack.c.h.b16 %v398
  %v555 = vunpack.c.l.b16 %v399
  %v556 = vunpack.c.h.b16 %v399
  %v557 = vunpack.c.l.b16 %v400
  %v558 = vunpack.c.h.b16 %v400
  %v559 = vunpack.c.l.b16 %v401
  %v560 = vunpack.c.h.b16 %v401
  %v561 = vunpack.c.l.b16 %v402
  %v562 = vunpack.c.h.b16 %v402
  %v563 = vunpack.c.l.b16 %v403
  %v564 = vunpack.c.h.b16 %v403
  %v565 = vunpack.c.l.b16 %v404
  %v566 = vunpack.c.h.b16 %v404
  %v567 = vpack.c.b16 %v469, %v467
  %v568 = vpack.c.b16 %v470, %v468
  %v569 = vpack.c.b16 %v473, %v471
  %v570 = vpack.c.b16 %v474, %v472
  %v571 = vpack.c.b16 %v477, %v475
  %v572 = vpack.c.b16 %v478, %v476
  %v573 = vpack.c.b16 %v481, %v479
  %v574 = vpack.c.b16 %v482, %v480
  %v575 = vpack.c.b16 %v485, %v483
  %v576 = vpack.c.b16 %v486, %v484
  %v577 = vpack.c.b16 %v489, %v487
  %v578 = vpack.c.b16 %v490, %v488
  %v579 = vpack.c.b16 %v493, %v491
  %v580 = vpack.c.b16 %v494, %v492
  %v581 = vpack.c.b16 %v497, %v495
  %v582 = vpack.c.b16 %v498, %v496
  %v583 = vpack.c.b16 %v501, %v499
  %v584 = vpack.c.b16 %v502, %v500
  %v585 = vpack.c.b16 %v505, %v503
  %v586 = vpack.c.b16 %v506, %v504
  %v587 = vpack.c.b16 %v509, %v507
  %v588 = vpack.c.b16 %v510, %v508
  %v589 = vpack.c.b16 %v513, %v511
  %v590 = vpack.c.b16 %v514, %v512
  %v591 = vpack.c.b16 %v517, %v515
  %v592 = vpack.c.b16 %v518, %v516
  %v593 = vpack.c.b16 %v521, %v519
  %v594 = vpack.c.b16 %v522, %v520
  %v595 = vpack.c.b16 %v525, %v523
  %v596 = vpack.c.b16 %v526, %v524
  %v597 = vpack.c.b16 %v529, %v527
  %v598 = vpack.c.b16 %v530, %v528
  %v599 = vpack.c.b16 %v533, %v531
  %v600 = vpack.c.b16 %v534, %v532
  %v601 = vpack.c.b16 %v537, %v535
  %v602 = vpack.c.b16 %v538, %v536
  %v603 = vpack.c.b16 %v541, %v539
  %v604 = vpack.c.b16 %v542, %v540
  %v605 = vpack.c.b16 %v545, %v543
  %v606 = vpack.c.b16 %v546, %v544
  %v607 = vpack.c.b16 %v549, %v547
  %v608 = vpack.c.b16 %v550, %v548
  %v609 = vpack.c.b16 %v553, %v551
  %v610 = vpack.c.b16 %v554, %v552
  %v611 = vpack.c.b16 %v557, %v555
  %v612 = vpack.c.b16 %v558, %v556
  %v613 = vpack.c.b16 %v561, %v559
  %v614 = vpack.c.b16 %v562, %v560
  %v615 = vpack.c.b16 %v565, %v563
  %v616 = vpack.c.b16 %v566, %v564
  %vm667 = vcmask 130048
  %v669 = vsel %vm667, %v354, 0
  %671 = vmatprep.subr.bf16.mxu0 %v582
  %672 = vmatpush1.bf16.msra.mxu0 %v581
  %673 = vmatprep.subr.bf16.mxu0 %v580
  %674 = vmatpush1.bf16.msra.mxu0 %v579
  %675 = vmatprep.subr.bf16.mxu0 %v578
  %676 = vmatpush1.bf16.msra.mxu0 %v577
  %677 = vmatprep.subr.bf16.mxu0 %v576
  %678 = vmatpush1.bf16.msra.mxu0 %v575
  %679 = vmatprep.subr.bf16.mxu0 %v574
  %680 = vmatpush1.bf16.msra.mxu0 %v573
  %681 = vmatprep.subr.bf16.mxu0 %v572
  %682 = vmatpush1.bf16.msra.mxu0 %v571
  %683 = vmatprep.subr.bf16.mxu0 %v570
  %684 = vmatpush1.bf16.msra.mxu0 %v569
  %685 = vmatprep.subr.bf16.mxu0 %v568
  %686 = vmatpush1.bf16.msra.mxu0 %v567
  %687 = vmatprep.subr.bf16.mxu0 %v598
  %688 = vmatpush2.bf16.msra.mxu0 %v597
  %689 = vmatprep.subr.bf16.mxu0 %v596
  %690 = vmatpush2.bf16.msra.mxu0 %v595
  %691 = vmatprep.subr.bf16.mxu0 %v594
  %692 = vmatpush2.bf16.msra.mxu0 %v593
  %693 = vmatprep.subr.bf16.mxu0 %v592
  %694 = vmatpush2.bf16.msra.mxu0 %v591
  %695 = vmatprep.subr.bf16.mxu0 %v590
  %696 = vmatpush2.bf16.msra.mxu0 %v589
  %697 = vmatprep.subr.bf16.mxu0 %v588
  %698 = vmatpush2.bf16.msra.mxu0 %v587
  %699 = vmatprep.subr.bf16.mxu0 %v586
  %700 = vmatpush2.bf16.msra.mxu0 %v585
  %701 = vmatprep.subr.bf16.mxu0 %v584
  %702 = vmatpush2.bf16.msra.mxu0 %v583
  %703 = vmatprep.mubr.bf16.mxu0 %v352
  %704 = vmatmul.mubr.bf16.gmra.mxu0 %v351
  %v705 = vpop.f32.mrf.mxu0
  %v706 = vadd.f32 %v410, %v705
  %v707 = vpop.f32.mrf.mxu0
  %v708 = vadd.f32 %v414, %v707
  %v709 = vpop.f32.mrf.mxu0
  %v710 = vpop.f32.mrf.mxu0
  %711 = vdwg.mxu0
  %712 = vmatprep.subr.bf16.mxu0 %v614
  %713 = vmatpush1.bf16.msra.mxu0 %v613
  %714 = vmatprep.subr.bf16.mxu0 %v612
  %715 = vmatpush1.bf16.msra.mxu0 %v611
  %716 = vmatprep.subr.bf16.mxu0 %v610
  %717 = vmatpush1.bf16.msra.mxu0 %v609
  %718 = vmatprep.subr.bf16.mxu0 %v608
  %719 = vmatpush1.bf16.msra.mxu0 %v607
  %720 = vmatprep.subr.bf16.mxu0 %v606
  %721 = vmatpush1.bf16.msra.mxu0 %v605
  %722 = vmatprep.subr.bf16.mxu0 %v604
  %723 = vmatpush1.bf16.msra.mxu0 %v603
  %724 = vmatprep.subr.bf16.mxu0 %v602
  %725 = vmatpush1.bf16.msra.mxu0 %v601
  %726 = vmatprep.subr.bf16.mxu0 %v600
  %727 = vmatpush1.bf16.msra.mxu0 %v599
  %728 = vmatprep.subr.bf16.mxu0 0
  %729 = vmatpush2.bf16.msra.mxu0 0
  %730 = vmatprep.subr.bf16.mxu0 0
  %731 = vmatpush2.bf16.msra.mxu0 0
  %732 = vmatprep.subr.bf16.mxu0 0
  %733 = vmatpush2.bf16.msra.mxu0 0
  %734 = vmatprep.subr.bf16.mxu0 0
  %735 = vmatpush2.bf16.msra.mxu0 0
  %736 = vmatprep.subr.bf16.mxu0 0
  %737 = vmatpush2.bf16.msra.mxu0 0
  %738 = vmatprep.subr.bf16.mxu0 0
  %739 = vmatpush2.bf16.msra.mxu0 0
  %740 = vmatprep.subr.bf16.mxu0 0
  %741 = vmatpush2.bf16.msra.mxu0 0
  %742 = vmatprep.subr.bf16.mxu0 %v616
  %743 = vmatpush2.bf16.msra.mxu0 %v615
  %744 = vmatprep.mubr.bf16.mxu0 %v669
  %745 = vmatmul.mubr.bf16.gmra.mxu0 %v353
  %v746 = vpop.f32.mrf.mxu0
  %v747 = vadd.f32 %v706, %v746
  %v748 = vpop.f32.mrf.mxu0
  %v749 = vadd.f32 %v708, %v748
  %v750 = vpop.f32.mrf.mxu0
  %v751 = vpop.f32.mrf.mxu0
  %752 = vdwg.mxu0
  %v753 = vmax.f32 %v747, 0.0
  %v754 = vmax.f32 %v749, 0.0
  %v755 = vpack.c.bf16 %v753, %v753
  %v756 = vpack.c.bf16 %v754, %v754
  %v757 = vld [vmem:[%s5] sm:$0xff]
  %v758 = vld [vmem:[%s5 + $0x8] sm:$0xff]
  %v759 = vld [vmem:[%s5 + $0x10] sm:$0xff]
  %v760 = vld [vmem:[%s5 + $0x18] sm:$0xff]
  %v761 = vld [vmem:[%s5 + $0x20] sm:$0xff]
  %v762 = vld [vmem:[%s5 + $0x28] sm:$0xff]
  %v763 = vld [vmem:[%s5 + $0x30] sm:$0xff]
  %v764 = vld [vmem:[%s5 + $0x38] sm:$0xff]
  %v765 = vld [vmem:[%s5 + $0x40] sm:$0xff]
  %v766 = vld [vmem:[%s5 + $0x48] sm:$0xff]
  %v767 = vld [vmem:[%s5 + $0x50] sm:$0xff]
  %v768 = vld [vmem:[%s5 + $0x58] sm:$0xff]
  %v769 = vld [vmem:[%s5 + $0x60] sm:$0xff]
  %v770 = vld [vmem:[%s5 + $0x68] sm:$0xff]
  %v771 = vld [vmem:[%s5 + $0x70] sm:$0xff]
  %v772 = vld [vmem:[%s5 + $0x78] sm:$0xff]
  %v773 = vld [vmem:[%s5 + $0x80] sm:$0xff]
  %v774 = vld [vmem:[%s5 + $0x88] sm:$0xff]
  %v775 = vld [vmem:[%s5 + $0x90] sm:$0xff]
  %v776 = vld [vmem:[%s5 + $0x98] sm:$0xff]
  %v777 = vld [vmem:[%s5 + $0xa0] sm:$0xff]
  %v778 = vld [vmem:[%s5 + $0xa8] sm:$0xff]
  %v779 = vld [vmem:[%s5 + $0xb0] sm:$0xff]
  %v780 = vld [vmem:[%s5 + $0xb8] sm:$0xff]
  %v781 = vld [vmem:[%s5 + $0xc0] sm:$0xff]
  %v782 = vld [vmem:[%s6] sm:$0x3]
  %v784 = vlaneseq
  %v785 = vshrl.u32 %v784, 7
  %v786 = vsub.s32 0, %v785
  %v787 = vrot.slane %v782, %v786
  %v788 = vlaneseq
  %v789 = vshrl.u32 %v788, 7
  %v790 = vsub.s32 1, %v789
  %v791 = vrot.slane %v782, %v790
  %v819 = vunpack.c.l.b16 %v757
  %v820 = vunpack.c.h.b16 %v757
  %v821 = vunpack.c.l.b16 %v758
  %v822 = vunpack.c.h.b16 %v758
  %v823 = vunpack.c.l.b16 %v759
  %v824 = vunpack.c.h.b16 %v759
  %v825 = vunpack.c.l.b16 %v760
  %v826 = vunpack.c.h.b16 %v760
  %v827 = vunpack.c.l.b16 %v761
  %v828 = vunpack.c.h.b16 %v761
  %v829 = vunpack.c.l.b16 %v762
  %v830 = vunpack.c.h.b16 %v762
  %v831 = vunpack.c.l.b16 %v763
  %v832 = vunpack.c.h.b16 %v763
  %v833 = vunpack.c.l.b16 %v764
  %v834 = vunpack.c.h.b16 %v764
  %v835 = vunpack.c.l.b16 %v765
  %v836 = vunpack.c.h.b16 %v765
  %v837 = vunpack.c.l.b16 %v766
  %v838 = vunpack.c.h.b16 %v766
  %v839 = vunpack.c.l.b16 %v767
  %v840 = vunpack.c.h.b16 %v767
  %v841 = vunpack.c.l.b16 %v768
  %v842 = vunpack.c.h.b16 %v768
  %v843 = vunpack.c.l.b16 %v769
  %v844 = vunpack.c.h.b16 %v769
  %v845 = vunpack.c.l.b16 %v770
  %v846 = vunpack.c.h.b16 %v770
  %v847 = vunpack.c.l.b16 %v771
  %v848 = vunpack.c.h.b16 %v771
  %v849 = vunpack.c.l.b16 %v772
  %v850 = vunpack.c.h.b16 %v772
  %v851 = vunpack.c.l.b16 %v773
  %v852 = vunpack.c.h.b16 %v773
  %v853 = vunpack.c.l.b16 %v774
  %v854 = vunpack.c.h.b16 %v774
  %v855 = vunpack.c.l.b16 %v775
  %v856 = vunpack.c.h.b16 %v775
  %v857 = vunpack.c.l.b16 %v776
  %v858 = vunpack.c.h.b16 %v776
  %v859 = vunpack.c.l.b16 %v777
  %v860 = vunpack.c.h.b16 %v777
  %v861 = vunpack.c.l.b16 %v778
  %v862 = vunpack.c.h.b16 %v778
  %v863 = vunpack.c.l.b16 %v779
  %v864 = vunpack.c.h.b16 %v779
  %v865 = vunpack.c.l.b16 %v780
  %v866 = vunpack.c.h.b16 %v780
  %v867 = vunpack.c.l.b16 %v781
  %v868 = vunpack.c.h.b16 %v781
  %v869 = vpack.c.b16 %v821, %v819
  %v870 = vpack.c.b16 %v822, %v820
  %v871 = vpack.c.b16 %v825, %v823
  %v872 = vpack.c.b16 %v826, %v824
  %v873 = vpack.c.b16 %v829, %v827
  %v874 = vpack.c.b16 %v830, %v828
  %v875 = vpack.c.b16 %v833, %v831
  %v876 = vpack.c.b16 %v834, %v832
  %v877 = vpack.c.b16 %v837, %v835
  %v878 = vpack.c.b16 %v838, %v836
  %v879 = vpack.c.b16 %v841, %v839
  %v880 = vpack.c.b16 %v842, %v840
  %v881 = vpack.c.b16 %v845, %v843
  %v882 = vpack.c.b16 %v846, %v844
  %v883 = vpack.c.b16 %v849, %v847
  %v884 = vpack.c.b16 %v850, %v848
  %v885 = vpack.c.b16 %v853, %v851
  %v886 = vpack.c.b16 %v854, %v852
  %v887 = vpack.c.b16 %v857, %v855
  %v888 = vpack.c.b16 %v858, %v856
  %v889 = vpack.c.b16 %v861, %v859
  %v890 = vpack.c.b16 %v862, %v860
  %v891 = vpack.c.b16 %v865, %v863
  %v892 = vpack.c.b16 %v866, %v864
  %v893 = vpack.c.b16 %v867, %v867
  %v894 = vpack.c.b16 %v868, %v868
  %vm919 = vcmask 588800
  %v921 = vsel %vm919, %v756, 0
  %vm923 = vcmask 1043456
  %v925 = vsel %vm923, %v893, 0
  %v928 = vsel %vm923, %v894, 0
  %930 = vmatprep.subr.bf16.mxu0 %v884
  %931 = vmatpush1.bf16.msra.mxu0 %v883
  %932 = vmatprep.subr.bf16.mxu0 %v882
  %933 = vmatpush1.bf16.msra.mxu0 %v881
  %934 = vmatprep.subr.bf16.mxu0 %v880
  %935 = vmatpush1.bf16.msra.mxu0 %v879
  %936 = vmatprep.subr.bf16.mxu0 %v878
  %937 = vmatpush1.bf16.msra.mxu0 %v877
  %938 = vmatprep.subr.bf16.mxu0 %v876
  %939 = vmatpush1.bf16.msra.mxu0 %v875
  %940 = vmatprep.subr.bf16.mxu0 %v874
  %941 = vmatpush1.bf16.msra.mxu0 %v873
  %942 = vmatprep.subr.bf16.mxu0 %v872
  %943 = vmatpush1.bf16.msra.mxu0 %v871
  %944 = vmatprep.subr.bf16.mxu0 %v870
  %945 = vmatpush1.bf16.msra.mxu0 %v869
  %946 = vmatprep.subr.bf16.mxu0 0
  %947 = vmatpush2.bf16.msra.mxu0 0
  %948 = vmatprep.subr.bf16.mxu0 0
  %949 = vmatpush2.bf16.msra.mxu0 0
  %950 = vmatprep.subr.bf16.mxu0 0
  %951 = vmatpush2.bf16.msra.mxu0 0
  %952 = vmatprep.subr.bf16.mxu0 %v928
  %953 = vmatpush2.bf16.msra.mxu0 %v925
  %954 = vmatprep.subr.bf16.mxu0 %v892
  %955 = vmatpush2.bf16.msra.mxu0 %v891
  %956 = vmatprep.subr.bf16.mxu0 %v890
  %957 = vmatpush2.bf16.msra.mxu0 %v889
  %958 = vmatprep.subr.bf16.mxu0 %v888
  %959 = vmatpush2.bf16.msra.mxu0 %v887
  %960 = vmatprep.subr.bf16.mxu0 %v886
  %961 = vmatpush2.bf16.msra.mxu0 %v885
  %962 = vmatprep.mubr.bf16.mxu0 %v921
  %963 = vmatmul.mubr.bf16.gmra.mxu0 %v755
  %v964 = vpop.f32.mrf.mxu0
  %v965 = vadd.f32 %v787, %v964
  %v966 = vpop.f32.mrf.mxu0
  %v967 = vadd.f32 %v791, %v966
  %v968 = vpop.f32.mrf.mxu0
  %v969 = vpop.f32.mrf.mxu0
  %970 = vdwg.mxu0
  %v971 = vmax.f32 %v965, 0.0
  %v972 = vmax.f32 %v967, 0.0
  %v973 = vld [vmem:[%s7] sm:$0x3]
  %v975 = vlaneseq
  %v976 = vshrl.u32 %v975, 7
  %v977 = vsub.s32 0, %v976
  %v978 = vrot.slane %v973, %v977
  %v979 = vlaneseq
  %v980 = vshrl.u32 %v979, 7
  %v981 = vsub.s32 1, %v980
  %v982 = vrot.slane %v973, %v981
  %v985 = vmul.f32 %v971, %v978
  %v986 = vmul.f32 %v972, %v982
  %v987 = vsel %vm919, %v986, 0.0
  %v988 = vadd.f32 %v985, %v987
  %989 = vadd.xlane.f32.xlu0 %v988
  %v990 = vpop.xlane.xlu0 %989
  %v991 = vld [vmem:[#allocation2] sm:$0x1]
  %v993 = vlaneseq
  %v994 = vshrl.u32 %v993, 7
  %v995 = vsub.s32 0, %v994
  %v996 = vrot.slane %v991, %v995
  %v998 = vadd.f32 %v990, %v996
  %vm999 = vcmask 7168
  %1000 = vst.msk [vmem:[%s9] sm:$0xff] %vm999, %v998
  // Predicated region
  $region38: #{ddpg_critic_forward.1} parent=0 // pred_check
    _
  $region39: #{ddpg_critic_forward.1} parent=0 // pred_check_branch
    %1002 = sbr.rel (0) target = $region41
  $region40: #{ddpg_critic_forward.1} parent=0 // pred_region
    _
  $region41: #{ddpg_critic_forward.1} parent=0 // pred_fallthru
    _
  // Predicated region
  $region42: #{ddpg_critic_forward.1} parent=0 // pred_check
    _
  $region43: #{ddpg_critic_forward.1} parent=0 // pred_check_branch
    %1004 = sbr.rel (0) target = $region45
  $region44: #{ddpg_critic_forward.1} parent=0 // pred_region
    _
  $region45: #{ddpg_critic_forward.1} parent=0 // pred_fallthru
    _

</llo_original>
